<compile_context>
chip_gen: v7x
topology: tpu7x:2x2x1
jax: 0.10.0
libtpu: 0.0.40
codegen_flags: <defaults>
</compile_context>

<pallas_src>
import math

import jax
import jax.numpy as jnp
from jax.experimental import pallas as pl
from jax.experimental.pallas import tpu as pltpu


def _round_up(x, m):
    return ((x + m - 1) // m) * m


def _cdiv(a, b):
    return -(-a // b)


# ---------------------------------------------------------------------------
# Kernels
# ---------------------------------------------------------------------------
def _linear_kernel_f32_out(x_ref, w_ref, b_ref, o_ref):
    """f32 output: accumulate directly in the resident output block (no scratch)."""
    k = pl.program_id(2)

    @pl.when(k == 0)
    def _():
        # Fold the bias into the accumulator init -> no separate finalize pass.
        o_ref[...] = jnp.broadcast_to(b_ref[...], o_ref.shape)

    o_ref[...] += jnp.dot(
        x_ref[...], w_ref[...], preferred_element_type=jnp.float32
    )


def _linear_kernel_acc(x_ref, w_ref, b_ref, o_ref, acc_ref):
    """Low-precision output: f32 VMEM accumulator + cast in the finalize step."""
    k = pl.program_id(2)

    @pl.when(k == 0)
    def _():
        acc_ref[...] = jnp.zeros_like(acc_ref)

    acc_ref[...] += jnp.dot(
        x_ref[...], w_ref[...], preferred_element_type=jnp.float32
    )

    @pl.when(k == pl.num_programs(2) - 1)
    def _():
        # Bias add + cast ride the finalize store (VPU slack), f32 epilogue
        # (safe on v5e which has no bf16 VPU).
        o_ref[...] = (acc_ref[...] + b_ref[...]).astype(o_ref.dtype)


# ---------------------------------------------------------------------------
# pallas_call wrapper
# ---------------------------------------------------------------------------
def _pallas_linear(x, w, b2d, out_dtype, tm, tn, tk, vmem_limit):
    M, K = x.shape
    _, N = w.shape
    grid = (M // tm, N // tn, K // tk)

    f32_out = jnp.dtype(out_dtype) == jnp.dtype(jnp.float32)
    kernel = _linear_kernel_f32_out if f32_out else _linear_kernel_acc
    scratch = [] if f32_out else [pltpu.VMEM((tm, tn), jnp.float32)]

    return pl.pallas_call(
        kernel,
        out_shape=jax.ShapeDtypeStruct((M, N), out_dtype),
        grid_spec=pltpu.PrefetchScalarGridSpec(
            num_scalar_prefetch=0,
            grid=grid,
            in_specs=[
                pl.BlockSpec((tm, tk), lambda i, j, k: (i, k)),
                pl.BlockSpec((tk, tn), lambda i, j, k: (k, j)),
                pl.BlockSpec((1, tn), lambda i, j, k: (0, j)),
            ],
            out_specs=pl.BlockSpec((tm, tn), lambda i, j, k: (i, j)),
            scratch_shapes=scratch,
        ),
        compiler_params=pltpu.CompilerParams(
            dimension_semantics=("parallel", "parallel", "arbitrary"),
            vmem_limit_bytes=vmem_limit,
        ),
    )(x, w, b2d)


# ---------------------------------------------------------------------------
# Per-generation config + tile selection
# ---------------------------------------------------------------------------
def _tpu_config():
    """Tile caps + VMEM budget per generation.

    v5e/v6e (128 MiB VMEM, 1 TC): big tiles, 96 MiB scoped limit.
    v7x or unknown (64 MiB VMEM/TC, 2 TCs): 512-class tiles, 48 MiB limit, and
    make sure >=2 parallel output blocks exist so both TensorCores get work.
    """
    vmem = None
    try:
        vmem = getattr(pltpu.get_tpu_info(), "vmem_capacity_bytes", None)
    except Exception:
        vmem = None
    if vmem is not None and vmem >= 100 * (1 << 20):
        return dict(tm=512, tn=1024, tk=1024, vmem_limit=96 << 20, multi_core=False)
    return dict(tm=512, tn=512, tk=512, vmem_limit=48 << 20, multi_core=True)


def _pick_tile(dim, max_tile, step):
    """Tile (multiple of `step`, <= cap) minimising padding of `dim`;
    ties broken toward larger tiles (better reuse, fewer grid steps)."""
    max_tile = max(step, (max_tile // step) * step)
    dim_al = _round_up(dim, step)
    if dim_al <= max_tile:
        return dim_al  # single block covers the whole dim with minimal pad
    best_t, best_pad = step, None
    t = max_tile
    while t >= step:
        pad = _round_up(dim, t) - dim
        if best_pad is None or pad < best_pad:
            best_t, best_pad = t, pad
        t -= step
    return best_t


def _split_tile(dim, tile, step):
    """Shrink `tile` (multiple of `step`) so `dim` spans >=2 blocks, minimising
    padding; returns None if impossible (dim fits in a single `step` block)."""
    best_t, best_pad = None, None
    t = min(tile, _round_up(dim, step))
    t = max(step, (t // step) * step)
    while t >= step:
        blocks = _cdiv(dim, t)
        if blocks >= 2:
            pad = blocks * t - dim
            if best_pad is None or pad < best_pad:
                best_t, best_pad = t, pad
        t -= step
    return best_t


# ---------------------------------------------------------------------------
# Public entry point
# ---------------------------------------------------------------------------
def my_linear(x, w, b, *, use_pallas=None, compute_dtype=None,
              tm=None, tn=None, tk=None):
    """y = x @ w + b (bias broadcast along batch), matching MyLinear.forward."""
    M, K = x.shape
    K2, N = w.shape
    assert K == K2 and b.shape == (N,)
    out_dtype = x.dtype

    # Tiny problems: pallas_call fixed cost dominates -> let XLA fuse it.
    if use_pallas is None:
        use_pallas = (M * N * K) >= 1_000_000
    if not use_pallas:
        return (x @ w + b).astype(out_dtype)

    if compute_dtype is not None:  # e.g. jnp.bfloat16 on v6e/v7x if accuracy permits
        x = x.astype(compute_dtype)
        w = w.astype(compute_dtype)
    # TODO(synk): consider defaulting compute_dtype=bfloat16 on v6e/v7x (bf16-native
    # MXU, ~2-4x + half the x/w HBM traffic) once callers accept the looser tolerance.

    cfg = _tpu_config()
    tm = cfg["tm"] if tm is None else tm
    tn = cfg["tn"] if tn is None else tn
    tk = cfg["tk"] if tk is None else tk

    # Sublane alignment: 8 rows for 4-byte dtypes, 16 for bf16/f16, 32 for 1-byte.
    itemsize = jnp.dtype(x.dtype).itemsize
    sub_align = {4: 8, 2: 16, 1: 32}.get(itemsize, 8)

    # Minimal-padding tile selection; lane dims stay 128-dense (unmasked vst),
    # sublane dims stay aligned.
    tm_ = _pick_tile(M, tm, sub_align)
    tn_ = _pick_tile(N, tn, 128)
    tk_ = _pick_tile(K, tk, 128)
    Mp, Np, Kp = _round_up(M, tm_), _round_up(N, tn_), _round_up(K, tk_)

    # v7x megacore: ensure >=2 parallel (i, j) output blocks; prefer splitting N.
    if cfg["multi_core"] and (Mp // tm_) * (Np // tn_) < 2:
        t = _split_tile(N, tn_, 128)
        if t is not None:
            tn_ = t
            Np = _round_up(N, tn_)
        else:
            t = _split_tile(M, tm_, sub_align)
            if t is not None:
                tm_ = t
                Mp = _round_up(M, tm_)

    # Only pad what actually needs it (zero-padding K is numerically safe).
    xp = x if (Mp == M and Kp == K) else jnp.pad(x, ((0, Mp - M), (0, Kp - K)))
    wp = w if (Kp == K and Np == N) else jnp.pad(w, ((0, Kp - K), (0, Np - N)))
    bp = b if Np == N else jnp.pad(b, (0, Np - N))
    b2d = bp.reshape(1, Np).astype(jnp.float32)

    yp = _pallas_linear(xp, wp, b2d, out_dtype, tm_, tn_, tk_, cfg["vmem_limit"])
    return yp[:M, :N]


def init_params(key, in_features, out_features):
    """kaiming_uniform_(a=sqrt(5)) equivalent for w; small uniform for b.

    torch leaves b uninitialized (torch.empty); a deterministic uniform is used
    here so the script is reproducible.
    """
    kw, kb = jax.random.split(key)
    # kaiming uniform with a=sqrt(5): gain = sqrt(2/(1+a^2)) = sqrt(1/3)
    # torch's fan_in for an (in_features, out_features) tensor = size(1) = out_features
    fan_in = out_features
    gain = math.sqrt(2.0 / (1.0 + 5.0))
    bound = gain * math.sqrt(3.0 / fan_in)
    w = jax.random.uniform(kw, (in_features, out_features), jnp.float32,
                           minval=-bound, maxval=bound)
    b = jax.random.uniform(kb, (out_features,), jnp.float32,
                           minval=-0.1, maxval=0.1)
    return w, b


if __name__ == "__main__":
    key = jax.random.PRNGKey(0)
    kx, kp, kx2, kp2, kx3, kp3 = jax.random.split(key, 6)

    # 1) Small shape matching the PyTorch module's typical usage; force the
    #    Pallas path so the kernel is exercised (auto-dispatch would pick XLA).
    batch, in_features, out_features = 8, 32, 16
    x = jax.random.normal(kx, (batch, in_features), jnp.float32)
    w, b = init_params(kp, in_features, out_features)
    y = my_linear(x, w, b, use_pallas=True)
    jax.block_until_ready(y)
    assert y.shape == (batch, out_features)
    assert jnp.allclose(y, x @ w + b, atol=1e-5, rtol=1e-5)

    # 2) Tile-aligned shape exercising the K-reduction accumulator and the
    #    parallel M/N axes (and the megacore split on v7x-class configs).
    M, K, N = 512, 1024, 512
    x2 = jax.random.normal(kx2, (M, K), jnp.float32)
    w2, b2 = init_params(kp2, K, N)
    y2 = my_linear(x2, w2, b2, use_pallas=True)
    jax.block_until_ready(y2)
    assert y2.shape == (M, N)
    assert jnp.allclose(y2, x2 @ w2 + b2, atol=2e-3, rtol=2e-3)

    # 3) Ragged shape exercising the minimal-padding tile selection.
    M3, K3, N3 = 300, 200, 130
    x3 = jax.random.normal(kx3, (M3, K3), jnp.float32)
    w3, b3 = init_params(kp3, K3, N3)
    y3 = my_linear(x3, w3, b3, use_pallas=True)
    jax.block_until_ready(y3)
    assert y3.shape == (M3, N3)
    assert jnp.allclose(y3, x3 @ w3 + b3, atol=1e-4, rtol=1e-4)

    print("KERNEL_OK")
</pallas_src>

<mosaic_0001>
module attributes {stable_mosaic.version = 11 : i64} {
  func.func @_linear_kernel_f32_out(%arg0: i32, %arg1: i32, %arg2: i32, %arg3: memref<8x128xf32, #tpu.memory_space<vmem>>, %arg4: memref<128x128xf32, #tpu.memory_space<vmem>>, %arg5: memref<1x128xf32, #tpu.memory_space<vmem>>, %arg6: memref<8x128xf32, #tpu.memory_space<vmem>>) attributes {dimension_semantics = [#tpu.dimension_semantics<parallel>, #tpu.dimension_semantics<parallel>, #tpu.dimension_semantics<arbitrary>], iteration_bounds = array<i64: 1, 1, 1>, scalar_prefetch = 0 : i64, scratch_operands = 0 : i64, tpu.core_type = #tpu.core_type<tc>, window_params = [{transform_indices = @transform_0, window_bounds = array<i64: 8, 128>}, {transform_indices = @transform_1, window_bounds = array<i64: 128, 128>}, {transform_indices = @transform_2, window_bounds = array<i64: 1, 128>}, {transform_indices = @transform_3, window_bounds = array<i64: 8, 128>}]} {
    %c0_i32 = arith.constant 0 : i32
    %0 = arith.cmpi eq, %arg2, %c0_i32 : i32
    %1 = arith.extui %0 : i1 to i32
    %c0_i32_0 = arith.constant 0 : i32
    %2 = arith.cmpi ne, %1, %c0_i32_0 : i32
    scf.if %2 {
      %c0_8 = arith.constant 0 : index
      %c0_9 = arith.constant 0 : index
      %9 = vector.load %arg5[%c0_8, %c0_9] : memref<1x128xf32, #tpu.memory_space<vmem>>, vector<1x128xf32>
      %10 = vector.shape_cast %9 : vector<1x128xf32> to vector<1x128xf32>
      %11 = vector.broadcast %10 : vector<1x128xf32> to vector<8x128xf32>
      %c0_10 = arith.constant 0 : index
      %c0_11 = arith.constant 0 : index
      %12 = vector.load %arg6[%c0_10, %c0_11] : memref<8x128xf32, #tpu.memory_space<vmem>>, vector<8x128xf32>
      tpu.vector_store %arg6[%c0_10, %c0_11], %11 {strides = array<i32>} : memref<8x128xf32, #tpu.memory_space<vmem>>, vector<8x128xf32>,
    } else {
    }
    %c0 = arith.constant 0 : index
    %c0_1 = arith.constant 0 : index
    %3 = vector.load %arg6[%c0, %c0_1] : memref<8x128xf32, #tpu.memory_space<vmem>>, vector<8x128xf32>
    %c0_2 = arith.constant 0 : index
    %c0_3 = arith.constant 0 : index
    %4 = vector.load %arg3[%c0_2, %c0_3] : memref<8x128xf32, #tpu.memory_space<vmem>>, vector<8x128xf32>
    %c0_4 = arith.constant 0 : index
    %c0_5 = arith.constant 0 : index
    %5 = vector.load %arg4[%c0_4, %c0_5] : memref<128x128xf32, #tpu.memory_space<vmem>>, vector<128x128xf32>
    %cst = arith.constant dense<0.000000e+00> : vector<8x128xf32>
    %6 = tpu.matmul %4, %5, %cst {dimension_numbers = #tpu.dot_dimension_numbers<[1], [0], [0], [1], [0, 0, 1, 1], [], []>} : vector<8x128xf32>, vector<128x128xf32>, vector<8x128xf32> -> vector<8x128xf32>
    %7 = arith.addf %3, %6 : vector<8x128xf32>
    %c0_6 = arith.constant 0 : index
    %c0_7 = arith.constant 0 : index
    %8 = vector.load %arg6[%c0_6, %c0_7] : memref<8x128xf32, #tpu.memory_space<vmem>>, vector<8x128xf32>
    tpu.vector_store %arg6[%c0_6, %c0_7], %7 {strides = array<i32>} : memref<8x128xf32, #tpu.memory_space<vmem>>, vector<8x128xf32>,
    return
  }
  func.func @transform_0(%arg0: i32, %arg1: i32, %arg2: i32) -> (i32, i32) {
    %c0_i32 = arith.constant 0 : i32
    return %arg0, %arg2 : i32, i32
  }
  func.func @transform_1(%arg0: i32, %arg1: i32, %arg2: i32) -> (i32, i32) {
    %c0_i32 = arith.constant 0 : i32
    return %arg2, %arg1 : i32, i32
  }
  func.func @transform_2(%arg0: i32, %arg1: i32, %arg2: i32) -> (i32, i32) {
    %c0_i32 = arith.constant 0 : i32
    %c0_i32_0 = arith.constant 0 : i32
    return %c0_i32, %arg1 : i32, i32
  }
  func.func @transform_3(%arg0: i32, %arg1: i32, %arg2: i32) -> (i32, i32) {
    %c0_i32 = arith.constant 0 : i32
    return %arg0, %arg1 : i32, i32
  }
}

</mosaic_0001>

<llo_original>
// kernel: tpu_custom_call.1
$region0: #{tpu_custom_call.1}
  #allocation0 [shape = 'u32[]', space=smem, size = 0x4, offset = 0x4, fixed_abs, tag = 'smem constant byte address 0x4 - core index']
  #allocation1 [shape = 'u32[144,128]{1,0:T(1,128)}', space=vmem, size = 0x12000, scoped, tag = 'internal scratch']
  %s0 = inlined_call_operand.hbm [shape: f32[8,128], index: 0, kind: input, shape index: {}]
  %s1 = inlined_call_operand.hbm [shape: f32[128,128], index: 1, kind: input, shape index: {}]
  %s2 = inlined_call_operand.vmem [shape: f32[1,128], index: 2, kind: input, shape index: {}]
  %s3 = inlined_call_operand.hbm [shape: f32[8,128], index: 3, kind: output, shape index: {}]
  %s4 = sld [smem:[#allocation0]]
  $region34: #{tpu_custom_call.1} parent=0
    _
  %s6 = ssub.s32 1, %s4
  %s7 = scalar_select 0, %s6, %s4
  $region1: #{tpu_custom_call.1} parent=0
    #allocation2 [shape = 'u8[4096]{0}', space=vmem, size = 0x1000, scoped, tag = 'input window, operand 0, single buffered']
    #allocation3 [shape = 's32[1]{0}', space=sflag, size = 0x4, scoped, tag = 'scoped memory for tpu_custom_call.1']
    #allocation4 [shape = 's32[1]{0}', space=sflag, size = 0x4, scoped, tag = 'scoped memory for tpu_custom_call.1']
    #allocation5 [shape = 'u8[65536]{0}', space=vmem, size = 0x10000, scoped, tag = 'input window, operand 1, single buffered']
    #allocation6 [shape = 's32[1]{0}', space=sflag, size = 0x4, scoped, tag = 'scoped memory for tpu_custom_call.1']
    #allocation7 [shape = 'u8[4096]{0}', space=vmem, size = 0x1000, scoped, tag = 'output window, operand 0, single buffered']
    %8 = vsyncpa [#allocation3], 0
    %9 = vsyncpa [#allocation6], 0
    %10 = vsyncpa [#allocation4], 0
    // Predicated region
    $region2: #{tpu_custom_call.1} parent=1 // pred_check
      _
    $region3: #{tpu_custom_call.1} parent=1 // pred_check_branch
      %12 = sbr.rel (0) target = $region5
    $region4: #{tpu_custom_call.1} parent=1 // pred_region
      %s14 = ssub.s32 128, 128
      %15 = vsyncadd [#allocation3], %s14
      %s17 = sshll.u32 [#allocation2], 4
      %s18 = int_to_ptr.vmem [resolvable:$true] %s17
      %20 = dma.hbm_to_vmem [thread:$0]  %s0, 128, %s18, [#allocation3]
    $region5: #{tpu_custom_call.1} parent=1 // pred_fallthru
      _
    // Predicated region
    $region6: #{tpu_custom_call.1} parent=1 // pred_check
      _
    $region7: #{tpu_custom_call.1} parent=1 // pred_check_branch
      %22 = sbr.rel (0) target = $region9
    $region8: #{tpu_custom_call.1} parent=1 // pred_region
      %s24 = ssub.s32 2048, 2048
      %25 = vsyncadd [#allocation6], %s24
      %s26 = sshll.u32 [#allocation5], 4
      %s27 = int_to_ptr.vmem [resolvable:$true] %s26
      %32 = dma.hbm_to_vmem [thread:$0]  %s1, 2048, %s27, [#allocation6], 128, 128, 8
    $region9: #{tpu_custom_call.1} parent=1 // pred_fallthru
      _
    // Predicated region
    $region10: #{tpu_custom_call.1} parent=1 // pred_check
      _
    $region11: #{tpu_custom_call.1} parent=1 // pred_check_branch
      %34 = sbr.rel (0) target = $region13
    $region12: #{tpu_custom_call.1} parent=1 // pred_region
      _
    $region13: #{tpu_custom_call.1} parent=1 // pred_fallthru
      _
    // Predicated region
    $region14: #{tpu_custom_call.1} parent=1 // pred_check
      _
    $region15: #{tpu_custom_call.1} parent=1 // pred_check_branch
      %36 = sbr.rel (0) target = $region17
    $region16: #{tpu_custom_call.1} parent=1 // pred_region
      %37 = dma.done [#allocation3], 128
    $region17: #{tpu_custom_call.1} parent=1 // pred_fallthru
      _
    // Predicated region
    $region18: #{tpu_custom_call.1} parent=1 // pred_check
      _
    $region19: #{tpu_custom_call.1} parent=1 // pred_check_branch
      %39 = sbr.rel (0) target = $region21
    $region20: #{tpu_custom_call.1} parent=1 // pred_region
      %40 = dma.done [#allocation6], 2048
    $region21: #{tpu_custom_call.1} parent=1 // pred_fallthru
      _
    %p41 = scmp.eq.s32.totalorder 0, 0
    // Predicated region
    $region22: #{tpu_custom_call.1} parent=1 // pred_check
      %p42 = pneg %p41
    $region23: #{tpu_custom_call.1} parent=1 // pred_check_branch
      %44 = sbr.rel (%p42) target = $region25
    $region24: #{tpu_custom_call.1} parent=1 // pred_region
      %v45 = vld [vmem:[%s2] sm:$0x1]
      %v47 = vlaneseq
      %v48 = vshrl.u32 %v47, 7
      %v49 = vsub.s32 0, %v48
      %v50 = vrot.slane %v45, %v49
      %52 = vst [vmem:[#allocation7] sm:$0xff] %v50
    $region25: #{tpu_custom_call.1} parent=1 // pred_fallthru
      _
    %v53 = vld [vmem:[#allocation7] sm:$0xff]
    %v54 = vld [vmem:[#allocation2] sm:$0xff]
    %v55 = vld [vmem:[#allocation5] sm:$0xff]
    %v56 = vld [vmem:[#allocation5 + $0x8] sm:$0xff]
    %v57 = vld [vmem:[#allocation5 + $0x10] sm:$0xff]
    %v58 = vld [vmem:[#allocation5 + $0x18] sm:$0xff]
    %v59 = vld [vmem:[#allocation5 + $0x20] sm:$0xff]
    %v60 = vld [vmem:[#allocation5 + $0x28] sm:$0xff]
    %v61 = vld [vmem:[#allocation5 + $0x30] sm:$0xff]
    %v62 = vld [vmem:[#allocation5 + $0x38] sm:$0xff]
    %v63 = vld [vmem:[#allocation5 + $0x40] sm:$0xff]
    %v64 = vld [vmem:[#allocation5 + $0x48] sm:$0xff]
    %v65 = vld [vmem:[#allocation5 + $0x50] sm:$0xff]
    %v66 = vld [vmem:[#allocation5 + $0x58] sm:$0xff]
    %v67 = vld [vmem:[#allocation5 + $0x60] sm:$0xff]
    %v68 = vld [vmem:[#allocation5 + $0x68] sm:$0xff]
    %v69 = vld [vmem:[#allocation5 + $0x70] sm:$0xff]
    %v70 = vld [vmem:[#allocation5 + $0x78] sm:$0xff]
    %71 = vmatprep.subr.mxu0 0.0
    %72 = vmatpush1.msra.mxu0 %v55
    %73 = vmatprep.subr.mxu0 0.0
    %74 = vmatpush1.msra.mxu0 %v56
    %75 = vmatprep.subr.mxu0 0.0
    %76 = vmatpush1.msra.mxu0 %v57
    %77 = vmatprep.subr.mxu0 0.0
    %78 = vmatpush1.msra.mxu0 %v58
    %79 = vmatprep.subr.mxu0 0.0
    %80 = vmatpush1.msra.mxu0 %v59
    %81 = vmatprep.subr.mxu0 0.0
    %82 = vmatpush1.msra.mxu0 %v60
    %83 = vmatprep.subr.mxu0 0.0
    %84 = vmatpush1.msra.mxu0 %v61
    %85 = vmatprep.subr.mxu0 0.0
    %86 = vmatpush1.msra.mxu0 %v62
    %87 = vmatprep.subr.mxu0 0.0
    %88 = vmatpush1.msra.mxu0 %v63
    %89 = vmatprep.subr.mxu0 0.0
    %90 = vmatpush1.msra.mxu0 %v64
    %91 = vmatprep.subr.mxu0 0.0
    %92 = vmatpush1.msra.mxu0 %v65
    %93 = vmatprep.subr.mxu0 0.0
    %94 = vmatpush1.msra.mxu0 %v66
    %95 = vmatprep.subr.mxu0 0.0
    %96 = vmatpush1.msra.mxu0 %v67
    %97 = vmatprep.subr.mxu0 0.0
    %98 = vmatpush1.msra.mxu0 %v68
    %99 = vmatprep.subr.mxu0 0.0
    %100 = vmatpush1.msra.mxu0 %v69
    %101 = vmatprep.subr.mxu0 0.0
    %102 = vmatpush1.msra.mxu0 %v70
    %103 = vmatprep.subr.mxu0 0.0
    %104 = vmatpush1.msra.mxu0 0.0
    %105 = vmatprep.subr.mxu0 0.0
    %106 = vmatpush1.msra.mxu0 0.0
    %107 = vmatprep.subr.mxu0 0.0
    %108 = vmatpush1.msra.mxu0 0.0
    %109 = vmatprep.subr.mxu0 0.0
    %110 = vmatpush1.msra.mxu0 0.0
    %111 = vmatprep.subr.mxu0 0.0
    %112 = vmatpush1.msra.mxu0 0.0
    %113 = vmatprep.subr.mxu0 0.0
    %114 = vmatpush1.msra.mxu0 0.0
    %115 = vmatprep.subr.mxu0 0.0
    %116 = vmatpush1.msra.mxu0 0.0
    %117 = vmatprep.subr.mxu0 0.0
    %118 = vmatpush1.msra.mxu0 0.0
    %119 = vmatprep.subr.mxu0 0.0
    %120 = vmatpush1.msra.mxu0 0.0
    %121 = vmatprep.subr.mxu0 0.0
    %122 = vmatpush1.msra.mxu0 0.0
    %123 = vmatprep.subr.mxu0 0.0
    %124 = vmatpush1.msra.mxu0 0.0
    %125 = vmatprep.subr.mxu0 0.0
    %126 = vmatpush1.msra.mxu0 0.0
    %127 = vmatprep.subr.mxu0 0.0
    %128 = vmatpush1.msra.mxu0 0.0
    %129 = vmatprep.subr.mxu0 0.0
    %130 = vmatpush1.msra.mxu0 0.0
    %131 = vmatprep.subr.mxu0 0.0
    %132 = vmatpush1.msra.mxu0 0.0
    %133 = vmatprep.subr.mxu0 0.0
    %134 = vmatpush1.msra.mxu0 0.0
    %135 = vmatprep.mubr.f32.mxu0 0.0
    %136 = vmatmul.mubr.f32.gmra.mrb[0].mxu0 %v54
    %v137 = vpop.f32.mrb[0].mxu0
    %v138 = vadd.f32 0.0, %v137
    %v139 = vpop.f32.mrb[0].mxu0
    %140 = vdwg.mxu0
    %v141 = vadd.f32 %v53, %v138
    %142 = vst [vmem:[#allocation7] sm:$0xff] %v141
    // Predicated region
    $region26: #{tpu_custom_call.1} parent=1 // pred_check
      _
    $region27: #{tpu_custom_call.1} parent=1 // pred_check_branch
      %144 = sbr.rel (0) target = $region29
    $region28: #{tpu_custom_call.1} parent=1 // pred_region
      %s146 = ssub.s32 128, 128
      %147 = vsyncadd [#allocation4], %s146
      %s149 = sshll.u32 [#allocation7], 4
      %s150 = int_to_ptr.vmem [resolvable:$true] %s149
      %152 = dma.vmem_to_hbm [thread:$0]  %s150, 128, %s3, [#allocation4]
    $region29: #{tpu_custom_call.1} parent=1 // pred_fallthru
      _
    // Predicated region
    $region30: #{tpu_custom_call.1} parent=1 // pred_check
      _
    $region31: #{tpu_custom_call.1} parent=1 // pred_check_branch
      %154 = sbr.rel (0) target = $region33
    $region32: #{tpu_custom_call.1} parent=1 // pred_region
      %155 = dma.done [#allocation4], 128
    $region33: #{tpu_custom_call.1} parent=1 // pred_fallthru
      _
    %156 = vsyncpa [#allocation3], 1
    %157 = vsyncpa [#allocation6], 1
    %158 = vsyncpa [#allocation4], 1

</llo_original>
